<compile_context>
chip_gen: v5e
topology: v5e:2x2
jax: 0.10.0
libtpu: 0.0.40
codegen_flags: <defaults>
</compile_context>

<pallas_src>
import jax
import jax.numpy as jnp
from jax.experimental import pallas as pl
from jax.experimental.pallas import tpu as pltpu


def _round_up(x: int, m: int) -> int:
    return ((x + m - 1) // m) * m


def _vmem_capacity_bytes() -> int:
    """Per-TensorCore VMEM capacity; conservative fallback = v7x (64 MiB)."""
    try:
        return int(pltpu.get_tpu_info().vmem_capacity_bytes)
    except Exception:
        return 64 << 20


def _choose_tile_m(n_tokens: int, tile_m: int) -> int:
    """Row tile: multiple of 8, big, >=4 grid steps when that keeps tm>=256
    (2 steps per core on v7x megacore -> per-core double buffering), else
    >=2 steps; prefer a divisor of n_tokens (no ragged tail block)."""
    if n_tokens <= 8:
        return 8
    cap4 = _round_up(-(-n_tokens // 4), 8)
    cap2 = _round_up(-(-n_tokens // 2), 8)
    cap = cap4 if cap4 >= 256 else cap2
    tm = max(8, (min(tile_m, cap) // 8) * 8)
    if n_tokens % tm:
        for cand in range(tm, max(8, tm // 2) - 1, -8):
            if n_tokens % cand == 0:
                return cand
    return tm


def _const_spec(shape):
    """BlockSpec for an operand whose block index never changes: fetched once,
    single-buffered (halves resident-param VMEM vs the default 2 buffers)."""
    try:
        return pl.BlockSpec(shape, lambda i: (0, 0), pipeline_mode=pl.Buffered(1))
    except TypeError:  # older jax without pipeline_mode on BlockSpec
        return pl.BlockSpec(shape, lambda i: (0, 0))


def _make_mlp_kernel(num_layers: int, activate_final: bool, use_layer_norm: bool,
                     eps: float = 1e-5):
    """Fused MLP: (Linear -> ReLU)* -> Linear [-> ReLU] [-> LayerNorm]."""

    def kernel(*refs):
        x_ref = refs[0]
        o_ref = refs[-1]
        params = refs[1:-1]

        h = x_ref[...]
        for layer in range(num_layers):
            w_ref = params[2 * layer]
            b_ref = params[2 * layer + 1]
            # MXU operands in the weights' dtype (bf16 fast path for bf16
            # params; no-op for f32); accumulate in f32 on the MXU.
            h = jnp.dot(h.astype(w_ref.dtype), w_ref[...],
                        preferred_element_type=jnp.float32)
            h = h + b_ref[...].astype(jnp.float32)   # b is (1, out) -> broadcasts
            last = layer == num_layers - 1
            if (not last) or activate_final:
                h = jnp.maximum(h, 0.0)              # ReLU
            if not last:
                # Keep the materialized inter-layer activation in the next
                # layer's MXU dtype (bf16 when params are bf16): halves VMEM
                # scratch and vld traffic feeding the next matmul.
                h = h.astype(params[2 * (layer + 1)].dtype)

        if use_layer_norm:
            g_ref = params[2 * num_layers]
            beta_ref = params[2 * num_layers + 1]
            # Final width is unpadded, so plain statistics are exact.
            mean = jnp.mean(h, axis=-1, keepdims=True)
            centered = h - mean
            var = jnp.mean(centered * centered, axis=-1, keepdims=True)
            h = centered * jax.lax.rsqrt(var + eps)
            h = h * g_ref[...].astype(jnp.float32) + beta_ref[...].astype(jnp.float32)

        o_ref[...] = h.astype(o_ref.dtype)

    return kernel


def prepare_mlp_params(weights, biases, gamma=None, beta=None, *,
                       lane_pad=128, param_dtype=None):
    """One-time parameter preparation (do NOT call per forward pass).

    Args:
      weights: list of [in_dim, out_dim] matrices (PyTorch nn.Linear weight
        transposed).
      biases:  list of [out_dim] vectors.
      gamma, beta: optional LayerNorm affine params of shape [out_dim_last].
      lane_pad: hidden widths are zero-padded up to a multiple of this so
        intermediates are lane-dense. Padding is ZERO (required: padded weight
        cols / bias lanes must be zero so padded activations stay zero).
      param_dtype: optional cast for the weight matrices (e.g. jnp.bfloat16
        for the MXU fast path). Biases / gamma / beta stay f32.
    """
    num_layers = len(weights)
    dims = [int(weights[0].shape[0])] + [int(w.shape[1]) for w in weights]
    # Lane-pad only the hidden widths; input and final output dims stay exact.
    padded = [dims[0]] + [_round_up(d, lane_pad) for d in dims[1:-1]] + [dims[-1]]

    ws, bs = [], []
    for li in range(num_layers):
        rin, rout = padded[li], padded[li + 1]
        w = jnp.asarray(weights[li])
        if param_dtype is not None:
            w = w.astype(param_dtype)
        if w.shape != (rin, rout):
            w = jnp.pad(w, ((0, rin - w.shape[0]), (0, rout - w.shape[1])))
        b = jnp.asarray(biases[li], jnp.float32).reshape(1, -1)
        if b.shape[1] != rout:
            b = jnp.pad(b, ((0, 0), (0, rout - b.shape[1])))
        ws.append(w)
        bs.append(b)

    g2 = bt2 = None
    if gamma is not None:
        g2 = jnp.asarray(gamma, jnp.float32).reshape(1, -1)
        bt2 = jnp.asarray(beta, jnp.float32).reshape(1, -1)

    return {"weights": ws, "biases": bs, "gamma": g2, "beta": bt2,
            "dims": dims, "padded": padded}


def mlp_pallas(x, params, *, activate_final=False, tile_m=512, eps=1e-5):
    """Apply the fused MLP kernel to x of shape [..., input_dim]."""
    weights, biases = params["weights"], params["biases"]
    gamma, beta = params["gamma"], params["beta"]
    use_layer_norm = gamma is not None
    num_layers = len(weights)
    dims, padded = params["dims"], params["padded"]

    orig_shape = x.shape
    in_dim = orig_shape[-1]
    out_dim = dims[-1]

    x2 = x.reshape(-1, in_dim)
    n_tokens = x2.shape[0]

    x_isz = jnp.dtype(x2.dtype).itemsize
    param_list = weights + biases + ([gamma, beta] if use_layer_norm else [])
    param_bytes = sum(int(a.size) * jnp.dtype(a.dtype).itemsize for a in param_list)

    # --- VMEM-aware tile choice ------------------------------------------
    vmem_cap = _vmem_capacity_bytes()           # 128 MiB v5e/v6e, 64 MiB v7x
    vmem_budget = int(0.85 * vmem_cap)

    def _estimate(tm_):
        est = 2 * tm_ * in_dim * x_isz                 # double-buffered x tile
        est += 2 * tm_ * out_dim * x_isz               # double-buffered out tile
        est += param_bytes                             # single-buffered params
        # inter-layer activation scratch: f32 accumulator (+ narrow-dtype copy
        # feeding the next matmul) per layer boundary.
        for li in range(num_layers):
            w_isz = jnp.dtype(weights[li].dtype).itemsize
            extra = w_isz if li < num_layers - 1 else 0
            est += tm_ * padded[li + 1] * (4 + extra)
        return est + (2 << 20)                         # headroom

    tm = _choose_tile_m(n_tokens, tile_m)
    while tm > 8 and _estimate(tm) > vmem_budget:
        tm = max(8, ((tm // 2) // 8) * 8)

    vmem_limit = int(min(vmem_budget, max(16 << 20, int(1.5 * _estimate(tm)))))

    grid = (pl.cdiv(n_tokens, tm),)   # no wrapper row pad; ragged tail masked

    # --- specs -------------------------------------------------------------
    args = [x2]
    in_specs = [pl.BlockSpec((tm, in_dim), lambda i: (i, 0))]
    for w, b in zip(weights, biases):
        args += [w, b]
        in_specs += [_const_spec(w.shape), _const_spec(b.shape)]
    if use_layer_norm:
        args += [gamma, beta]
        in_specs += [_const_spec(gamma.shape), _const_spec(beta.shape)]

    kernel = _make_mlp_kernel(num_layers, activate_final, use_layer_norm, eps)

    flops = 2 * n_tokens * sum(padded[i] * padded[i + 1] for i in range(num_layers))
    bytes_accessed = (int(x2.size) * x_isz + param_bytes
                      + n_tokens * out_dim * x_isz)
    cost = pl.CostEstimate(flops=flops,
                           transcendentals=n_tokens if use_layer_norm else 0,
                           bytes_accessed=bytes_accessed)

    out = pl.pallas_call(
        kernel,
        out_shape=jax.ShapeDtypeStruct((n_tokens, out_dim), x.dtype),
        grid_spec=pltpu.PrefetchScalarGridSpec(
            num_scalar_prefetch=0,
            grid=grid,
            in_specs=in_specs,
            # last dim equals the full array dim -> legal even when < 128;
            # writing the true width avoids a padded-output HBM round trip.
            out_specs=pl.BlockSpec((tm, out_dim), lambda i: (i, 0)),
        ),
        compiler_params=pltpu.CompilerParams(
            dimension_semantics=("parallel",),
            vmem_limit_bytes=vmem_limit),
        cost_estimate=cost,
    )(*args)

    return out.reshape(*orig_shape[:-1], out_dim)


def mlp_reference(x, weights, biases, gamma=None, beta=None, *,
                  activate_final=False, eps=1e-5):
    """Pure-JAX reference matching the PyTorch MLP forward."""
    h = x.astype(jnp.float32)
    for i, (w, b) in enumerate(zip(weights, biases)):
        h = jnp.dot(h, w.astype(jnp.float32),
                    precision=jax.lax.Precision.HIGHEST) + b.astype(jnp.float32)
        if i < len(weights) - 1 or activate_final:
            h = jnp.maximum(h, 0.0)
    if gamma is not None:
        mean = jnp.mean(h, axis=-1, keepdims=True)
        var = jnp.mean((h - mean) ** 2, axis=-1, keepdims=True)
        h = (h - mean) * jax.lax.rsqrt(var + eps)
        h = h * gamma.astype(jnp.float32) + beta.astype(jnp.float32)
    return h.astype(x.dtype)


if __name__ == "__main__":
    # MLP(input_dim=32, hidden_dims=[64, 32], use_layer_norm=True,
    #     bias=True, activate_final=False)
    input_dim = 32
    hidden_dims = [64, 32]
    use_layer_norm = True
    activate_final = False

    key = jax.random.PRNGKey(0)
    kx, *kws = jax.random.split(key, 1 + 2 * len(hidden_dims))

    # Deterministic params (uniform, PyTorch-Linear-style bound), stored as
    # [in, out] (= transposed nn.Linear weight).
    dims = [input_dim] + hidden_dims
    weights, biases = [], []
    for li in range(len(hidden_dims)):
        fan_in, fan_out = dims[li], dims[li + 1]
        bound = 1.0 / (fan_in ** 0.5)
        weights.append(jax.random.uniform(kws[2 * li], (fan_in, fan_out),
                                          jnp.float32, -bound, bound))
        biases.append(jax.random.uniform(kws[2 * li + 1], (fan_out,),
                                         jnp.float32, -bound, bound))
    gamma = jnp.ones((hidden_dims[-1],), jnp.float32) if use_layer_norm else None
    beta = jnp.zeros((hidden_dims[-1],), jnp.float32) if use_layer_norm else None

    # Example input: [batch=2, nodes=128, input_dim=32]  -> 256 tokens
    x = jax.random.normal(kx, (2, 128, input_dim), jnp.float32)

    ref = mlp_reference(x, weights, biases, gamma, beta,
                        activate_final=activate_final)

    # f32 parameter path (bit-faithful to the module): tight tolerance.
    params_f32 = prepare_mlp_params(weights, biases, gamma, beta,
                                    param_dtype=None)
    out_f32 = jax.block_until_ready(
        mlp_pallas(x, params_f32, activate_final=activate_final))
    assert out_f32.shape == (2, 128, hidden_dims[-1])
    assert jnp.allclose(out_f32, ref, atol=5e-3, rtol=5e-3), "f32 mismatch vs reference"

    # bf16 weight path (MXU fast path): looser tolerance.
    params_bf16 = prepare_mlp_params(weights, biases, gamma, beta,
                                     param_dtype=jnp.bfloat16)
    out_bf16 = jax.block_until_ready(
        mlp_pallas(x, params_bf16, activate_final=activate_final))
    assert out_bf16.shape == (2, 128, hidden_dims[-1])
    assert jnp.allclose(out_bf16, ref, atol=5e-2, rtol=5e-2), "bf16 mismatch vs reference"

    print("KERNEL_OK")
</pallas_src>

<mosaic_0001>
module attributes {stable_mosaic.version = 11 : i64} {
  func.func @kernel(%arg0: i32, %arg1: memref<128x32xf32, #tpu.memory_space<vmem>>, %arg2: memref<32x128xf32, #tpu.memory_space<vmem>>, %arg3: memref<1x128xf32, #tpu.memory_space<vmem>>, %arg4: memref<128x32xf32, #tpu.memory_space<vmem>>, %arg5: memref<1x32xf32, #tpu.memory_space<vmem>>, %arg6: memref<1x32xf32, #tpu.memory_space<vmem>>, %arg7: memref<1x32xf32, #tpu.memory_space<vmem>>, %arg8: memref<128x32xf32, #tpu.memory_space<vmem>>) attributes {dimension_semantics = [#tpu.dimension_semantics<parallel>], iteration_bounds = array<i64: 2>, scalar_prefetch = 0 : i64, scratch_operands = 0 : i64, tpu.core_type = #tpu.core_type<tc>, window_params = [{transform_indices = @transform_0, window_bounds = array<i64: 128, 32>}, {pipeline_mode = #tpu.pipeline_mode<synchronous>, transform_indices = @transform_1, window_bounds = array<i64: 32, 128>}, {pipeline_mode = #tpu.pipeline_mode<synchronous>, transform_indices = @transform_2, window_bounds = array<i64: 1, 128>}, {pipeline_mode = #tpu.pipeline_mode<synchronous>, transform_indices = @transform_3, window_bounds = array<i64: 128, 32>}, {pipeline_mode = #tpu.pipeline_mode<synchronous>, transform_indices = @transform_4, window_bounds = array<i64: 1, 32>}, {pipeline_mode = #tpu.pipeline_mode<synchronous>, transform_indices = @transform_5, window_bounds = array<i64: 1, 32>}, {pipeline_mode = #tpu.pipeline_mode<synchronous>, transform_indices = @transform_6, window_bounds = array<i64: 1, 32>}, {transform_indices = @transform_7, window_bounds = array<i64: 128, 32>}]} {
    %c0 = arith.constant 0 : index
    %c0_0 = arith.constant 0 : index
    %0 = vector.load %arg1[%c0, %c0_0] : memref<128x32xf32, #tpu.memory_space<vmem>>, vector<128x32xf32>
    %c0_1 = arith.constant 0 : index
    %c0_2 = arith.constant 0 : index
    %1 = vector.load %arg2[%c0_1, %c0_2] : memref<32x128xf32, #tpu.memory_space<vmem>>, vector<32x128xf32>
    %cst = arith.constant dense<0.000000e+00> : vector<128x128xf32>
    %2 = tpu.matmul %0, %1, %cst {dimension_numbers = #tpu.dot_dimension_numbers<[1], [0], [0], [1], [0, 0, 1, 1], [], []>} : vector<128x32xf32>, vector<32x128xf32>, vector<128x128xf32> -> vector<128x128xf32>
    %c0_3 = arith.constant 0 : index
    %c0_4 = arith.constant 0 : index
    %3 = vector.load %arg3[%c0_3, %c0_4] : memref<1x128xf32, #tpu.memory_space<vmem>>, vector<1x128xf32>
    %4 = vector.broadcast %3 : vector<1x128xf32> to vector<128x128xf32>
    %5 = arith.addf %2, %4 : vector<128x128xf32>
    %cst_5 = arith.constant 0.000000e+00 : f32
    %6 = vector.broadcast %cst_5 : f32 to vector<128x128xf32>
    %7 = arith.maximumf %5, %6 : vector<128x128xf32>
    %c0_6 = arith.constant 0 : index
    %c0_7 = arith.constant 0 : index
    %8 = vector.load %arg4[%c0_6, %c0_7] : memref<128x32xf32, #tpu.memory_space<vmem>>, vector<128x32xf32>
    %cst_8 = arith.constant dense<0.000000e+00> : vector<128x32xf32>
    %9 = tpu.matmul %7, %8, %cst_8 {dimension_numbers = #tpu.dot_dimension_numbers<[1], [0], [0], [1], [0, 0, 1, 1], [], []>} : vector<128x128xf32>, vector<128x32xf32>, vector<128x32xf32> -> vector<128x32xf32>
    %c0_9 = arith.constant 0 : index
    %c0_10 = arith.constant 0 : index
    %10 = vector.load %arg5[%c0_9, %c0_10] : memref<1x32xf32, #tpu.memory_space<vmem>>, vector<1x32xf32>
    %11 = vector.broadcast %10 : vector<1x32xf32> to vector<128x32xf32>
    %12 = arith.addf %9, %11 : vector<128x32xf32>
    %cst_11 = arith.constant dense<0.000000e+00> : vector<128xf32>
    %13 = vector.multi_reduction <add>, %12, %cst_11 [1] : vector<128x32xf32> to vector<128xf32>
    %14 = vector.shape_cast %13 : vector<128xf32> to vector<128x1xf32>
    %cst_12 = arith.constant 3.200000e+01 : f32
    %15 = vector.broadcast %cst_12 : f32 to vector<128x1xf32>
    %16 = arith.divf %14, %15 : vector<128x1xf32>
    %17 = vector.broadcast %16 : vector<128x1xf32> to vector<128x32xf32>
    %18 = arith.subf %12, %17 : vector<128x32xf32>
    %19 = arith.mulf %18, %18 : vector<128x32xf32>
    %cst_13 = arith.constant dense<0.000000e+00> : vector<128xf32>
    %20 = vector.multi_reduction <add>, %19, %cst_13 [1] : vector<128x32xf32> to vector<128xf32>
    %21 = vector.shape_cast %20 : vector<128xf32> to vector<128x1xf32>
    %cst_14 = arith.constant 3.200000e+01 : f32
    %22 = vector.broadcast %cst_14 : f32 to vector<128x1xf32>
    %23 = arith.divf %21, %22 : vector<128x1xf32>
    %cst_15 = arith.constant 9.99999974E-6 : f32
    %24 = vector.broadcast %cst_15 : f32 to vector<128x1xf32>
    %25 = arith.addf %23, %24 : vector<128x1xf32>
    %26 = math.rsqrt %25 : vector<128x1xf32>
    %27 = vector.broadcast %26 : vector<128x1xf32> to vector<128x32xf32>
    %28 = arith.mulf %18, %27 : vector<128x32xf32>
    %c0_16 = arith.constant 0 : index
    %c0_17 = arith.constant 0 : index
    %29 = vector.load %arg6[%c0_16, %c0_17] : memref<1x32xf32, #tpu.memory_space<vmem>>, vector<1x32xf32>
    %30 = vector.broadcast %29 : vector<1x32xf32> to vector<128x32xf32>
    %31 = arith.mulf %28, %30 : vector<128x32xf32>
    %c0_18 = arith.constant 0 : index
    %c0_19 = arith.constant 0 : index
    %32 = vector.load %arg7[%c0_18, %c0_19] : memref<1x32xf32, #tpu.memory_space<vmem>>, vector<1x32xf32>
    %33 = vector.broadcast %32 : vector<1x32xf32> to vector<128x32xf32>
    %34 = arith.addf %31, %33 : vector<128x32xf32>
    %c0_20 = arith.constant 0 : index
    %c0_21 = arith.constant 0 : index
    %35 = vector.load %arg8[%c0_20, %c0_21] : memref<128x32xf32, #tpu.memory_space<vmem>>, vector<128x32xf32>
    tpu.vector_store %arg8[%c0_20, %c0_21], %34 {strides = array<i32>} : memref<128x32xf32, #tpu.memory_space<vmem>>, vector<128x32xf32>,
    return
  }
  func.func @transform_0(%arg0: i32) -> (i32, i32) {
    %c0_i32 = arith.constant 0 : i32
    %c0_i32_0 = arith.constant 0 : i32
    return %arg0, %c0_i32 : i32, i32
  }
  func.func @transform_1(%arg0: i32) -> (i32, i32) {
    %c0_i32 = arith.constant 0 : i32
    %c0_i32_0 = arith.constant 0 : i32
    %c0_i32_1 = arith.constant 0 : i32
    return %c0_i32, %c0_i32_0 : i32, i32
  }
  func.func @transform_2(%arg0: i32) -> (i32, i32) {
    %c0_i32 = arith.constant 0 : i32
    %c0_i32_0 = arith.constant 0 : i32
    %c0_i32_1 = arith.constant 0 : i32
    return %c0_i32, %c0_i32_0 : i32, i32
  }
  func.func @transform_3(%arg0: i32) -> (i32, i32) {
    %c0_i32 = arith.constant 0 : i32
    %c0_i32_0 = arith.constant 0 : i32
    %c0_i32_1 = arith.constant 0 : i32
    return %c0_i32, %c0_i32_0 : i32, i32
  }
  func.func @transform_4(%arg0: i32) -> (i32, i32) {
    %c0_i32 = arith.constant 0 : i32
    %c0_i32_0 = arith.constant 0 : i32
    %c0_i32_1 = arith.constant 0 : i32
    return %c0_i32, %c0_i32_0 : i32, i32
  }
  func.func @transform_5(%arg0: i32) -> (i32, i32) {
    %c0_i32 = arith.constant 0 : i32
    %c0_i32_0 = arith.constant 0 : i32
    %c0_i32_1 = arith.constant 0 : i32
    return %c0_i32, %c0_i32_0 : i32, i32
  }
  func.func @transform_6(%arg0: i32) -> (i32, i32) {
    %c0_i32 = arith.constant 0 : i32
    %c0_i32_0 = arith.constant 0 : i32
    %c0_i32_1 = arith.constant 0 : i32
    return %c0_i32, %c0_i32_0 : i32, i32
  }
  func.func @transform_7(%arg0: i32) -> (i32, i32) {
    %c0_i32 = arith.constant 0 : i32
    %c0_i32_0 = arith.constant 0 : i32
    return %arg0, %c0_i32 : i32, i32
  }
}

</mosaic_0001>

<llo_original>
// kernel: tpu_custom_call.1
$region0: #{tpu_custom_call.1}
  #allocation0 [shape = 'u32[]', space=smem, size = 0x4, offset = 0x4, fixed_abs, tag = 'smem constant byte address 0x4 - core index']
  #allocation1 [shape = 'u32[72,128]{1,0:T(1,128)}', space=vmem, size = 0x9000, scoped, tag = 'internal scratch']
  %s0 = inlined_call_operand.vmem [shape: f32[256,32], index: 0, kind: input, shape index: {}]
  %s1 = inlined_call_operand.vmem [shape: f32[32,128], index: 1, kind: input, shape index: {}]
  %s2 = inlined_call_operand.vmem [shape: f32[1,128], index: 2, kind: input, shape index: {}]
  %s3 = inlined_call_operand.vmem [shape: f32[128,32], index: 3, kind: input, shape index: {}]
  %s4 = inlined_call_operand.vmem [shape: f32[1,32], index: 4, kind: input, shape index: {}]
  %s5 = inlined_call_operand.vmem [shape: f32[1,32], index: 5, kind: input, shape index: {}]
  %s6 = inlined_call_operand.vmem [shape: f32[1,32], index: 6, kind: input, shape index: {}]
  %s7 = inlined_call_operand.vmem [shape: f32[256,32], index: 7, kind: output, shape index: {}]
  %s8 = sld [smem:[#allocation0]]
  $region61: #{tpu_custom_call.1} parent=0
    _
  %s10 = ssub.s32 1, %s8
  %s11 = scalar_select 0, %s10, %s8
  loop: start=0, step=1, limit=4
  $region2: #{tpu_custom_call.1} parent=0 // loop_pre_header
    _
  $region3: #{tpu_custom_call.1} parent=0 // loop_header
    %s13 = sphi 0, %s17
    %p14 = scmp.ge.s32.totalorder %s13, 4
    %s23 = sphi 0, %s25
    %s26 = sphi 0, %s23
    %s27 = sphi 0, %s26
    %s43 = sphi 0, %s27
    %s47 = sphi 0, %s47
    %s49 = sphi 0, %s47
    %s50 = sphi 0, %s49
    %s64 = sphi 0, %s50
    %s68 = sphi 0, %s68
    %s70 = sphi 0, %s68
    %s71 = sphi 0, %s70
    %s85 = sphi 0, %s71
    %s89 = sphi 0, %s89
    %s91 = sphi 0, %s89
    %s92 = sphi 0, %s91
    %s106 = sphi 0, %s92
    %s110 = sphi 0, %s110
    %s112 = sphi 0, %s110
    %s113 = sphi 0, %s112
    %s127 = sphi 0, %s113
    %s131 = sphi 0, %s131
    %s133 = sphi 0, %s131
    %s134 = sphi 0, %s133
    %s148 = sphi 0, %s134
    %s152 = sphi 0, %s152
    %s154 = sphi 0, %s152
    %s155 = sphi 0, %s154
    %s169 = sphi 0, %s155
    %s175 = sphi 0, %s177
    %s178 = sphi 0, %s175
    %s179 = sphi 0, %s178
    %s195 = sphi 0, %s179
  $region4: #{tpu_custom_call.1} parent=0 // loop_header_branch
    %16 = sbr.rel (%p14) target = $region8
  $region5: #{tpu_custom_call.1} parent=0 // loop_body
    %s18 = ssub.s32 %s13, 1
    %s19 = ssub.s32 %s13, 2
    %s20 = sadd.s32 %s13, 1
    %s21 = ssub.s32 %s13, %s20
    %p22 = scmp.eq.s32.totalorder %s21, 0
    %s24 = sadd.s32 %s23, 1
    %s25 = scalar_select %p22, %s23, %s24
    %p28 = pneg %p22
    %p29 = scmp.eq.s32.totalorder %s13, 1
    %p30 = por %p28, %p29
    %p31 = scmp.ne.s32.totalorder %s23, %s26
    %p32 = scmp.eq.s32.totalorder %s13, 0
    %p33 = por %p31, %p32
    %p34 = scmp.ne.s32.totalorder %s23, %s26
    %p35 = scmp.eq.s32.totalorder %s18, 1
    %p36 = por %p34, %p35
    %p37 = scmp.ne.s32.totalorder %s26, %s27
    %p38 = scmp.eq.s32.totalorder %s18, 0
    %p39 = por %p37, %p38
    %p40 = scmp.ne.s32.totalorder %s26, %s27
    %p41 = scmp.eq.s32.totalorder %s19, 1
    %p42 = por %p40, %p41
    %p44 = scmp.ne.s32.totalorder %s27, %s43
    %p45 = scmp.eq.s32.totalorder %s19, 0
    %p46 = por %p44, %p45
    %s48 = sadd.s32 %s47, 1
    %p51 = scmp.eq.s32.totalorder %s13, 1
    %p52 = scmp.ne.s32.totalorder %s47, %s49
    %p53 = scmp.eq.s32.totalorder %s13, 0
    %p54 = por %p52, %p53
    %p55 = scmp.ne.s32.totalorder %s47, %s49
    %p56 = scmp.eq.s32.totalorder %s18, 1
    %p57 = por %p55, %p56
    %p58 = scmp.ne.s32.totalorder %s49, %s50
    %p59 = scmp.eq.s32.totalorder %s18, 0
    %p60 = por %p58, %p59
    %p61 = scmp.ne.s32.totalorder %s49, %s50
    %p62 = scmp.eq.s32.totalorder %s19, 1
    %p63 = por %p61, %p62
    %p65 = scmp.ne.s32.totalorder %s50, %s64
    %p66 = scmp.eq.s32.totalorder %s19, 0
    %p67 = por %p65, %p66
    %s69 = sadd.s32 %s68, 1
    %p72 = scmp.eq.s32.totalorder %s13, 1
    %p73 = scmp.ne.s32.totalorder %s68, %s70
    %p74 = scmp.eq.s32.totalorder %s13, 0
    %p75 = por %p73, %p74
    %p76 = scmp.ne.s32.totalorder %s68, %s70
    %p77 = scmp.eq.s32.totalorder %s18, 1
    %p78 = por %p76, %p77
    %p79 = scmp.ne.s32.totalorder %s70, %s71
    %p80 = scmp.eq.s32.totalorder %s18, 0
    %p81 = por %p79, %p80
    %p82 = scmp.ne.s32.totalorder %s70, %s71
    %p83 = scmp.eq.s32.totalorder %s19, 1
    %p84 = por %p82, %p83
    %p86 = scmp.ne.s32.totalorder %s71, %s85
    %p87 = scmp.eq.s32.totalorder %s19, 0
    %p88 = por %p86, %p87
    %s90 = sadd.s32 %s89, 1
    %p93 = scmp.eq.s32.totalorder %s13, 1
    %p94 = scmp.ne.s32.totalorder %s89, %s91
    %p95 = scmp.eq.s32.totalorder %s13, 0
    %p96 = por %p94, %p95
    %p97 = scmp.ne.s32.totalorder %s89, %s91
    %p98 = scmp.eq.s32.totalorder %s18, 1
    %p99 = por %p97, %p98
    %p100 = scmp.ne.s32.totalorder %s91, %s92
    %p101 = scmp.eq.s32.totalorder %s18, 0
    %p102 = por %p100, %p101
    %p103 = scmp.ne.s32.totalorder %s91, %s92
    %p104 = scmp.eq.s32.totalorder %s19, 1
    %p105 = por %p103, %p104
    %p107 = scmp.ne.s32.totalorder %s92, %s106
    %p108 = scmp.eq.s32.totalorder %s19, 0
    %p109 = por %p107, %p108
    %s111 = sadd.s32 %s110, 1
    %p114 = scmp.eq.s32.totalorder %s13, 1
    %p115 = scmp.ne.s32.totalorder %s110, %s112
    %p116 = scmp.eq.s32.totalorder %s13, 0
    %p117 = por %p115, %p116
    %p118 = scmp.ne.s32.totalorder %s110, %s112
    %p119 = scmp.eq.s32.totalorder %s18, 1
    %p120 = por %p118, %p119
    %p121 = scmp.ne.s32.totalorder %s112, %s113
    %p122 = scmp.eq.s32.totalorder %s18, 0
    %p123 = por %p121, %p122
    %p124 = scmp.ne.s32.totalorder %s112, %s113
    %p125 = scmp.eq.s32.totalorder %s19, 1
    %p126 = por %p124, %p125
    %p128 = scmp.ne.s32.totalorder %s113, %s127
    %p129 = scmp.eq.s32.totalorder %s19, 0
    %p130 = por %p128, %p129
    %s132 = sadd.s32 %s131, 1
    %p135 = scmp.eq.s32.totalorder %s13, 1
    %p136 = scmp.ne.s32.totalorder %s131, %s133
    %p137 = scmp.eq.s32.totalorder %s13, 0
    %p138 = por %p136, %p137
    %p139 = scmp.ne.s32.totalorder %s131, %s133
    %p140 = scmp.eq.s32.totalorder %s18, 1
    %p141 = por %p139, %p140
    %p142 = scmp.ne.s32.totalorder %s133, %s134
    %p143 = scmp.eq.s32.totalorder %s18, 0
    %p144 = por %p142, %p143
    %p145 = scmp.ne.s32.totalorder %s133, %s134
    %p146 = scmp.eq.s32.totalorder %s19, 1
    %p147 = por %p145, %p146
    %p149 = scmp.ne.s32.totalorder %s134, %s148
    %p150 = scmp.eq.s32.totalorder %s19, 0
    %p151 = por %p149, %p150
    %s153 = sadd.s32 %s152, 1
    %p156 = scmp.eq.s32.totalorder %s13, 1
    %p157 = scmp.ne.s32.totalorder %s152, %s154
    %p158 = scmp.eq.s32.totalorder %s13, 0
    %p159 = por %p157, %p158
    %p160 = scmp.ne.s32.totalorder %s152, %s154
    %p161 = scmp.eq.s32.totalorder %s18, 1
    %p162 = por %p160, %p161
    %p163 = scmp.ne.s32.totalorder %s154, %s155
    %p164 = scmp.eq.s32.totalorder %s18, 0
    %p165 = por %p163, %p164
    %p166 = scmp.ne.s32.totalorder %s154, %s155
    %p167 = scmp.eq.s32.totalorder %s19, 1
    %p168 = por %p166, %p167
    %p170 = scmp.ne.s32.totalorder %s155, %s169
    %p171 = scmp.eq.s32.totalorder %s19, 0
    %p172 = por %p170, %p171
    %s173 = ssub.s32 %s13, %s20
    %p174 = scmp.eq.s32.totalorder %s173, 0
    %s176 = sadd.s32 %s175, 1
    %s177 = scalar_select %p174, %s175, %s176
    %p180 = pneg %p174
    %p181 = scmp.eq.s32.totalorder %s13, 1
    %p182 = por %p180, %p181
    %p183 = scmp.ne.s32.totalorder %s175, %s178
    %p184 = scmp.eq.s32.totalorder %s13, 0
    %p185 = por %p183, %p184
    %p186 = scmp.ne.s32.totalorder %s175, %s178
    %p187 = scmp.eq.s32.totalorder %s18, 1
    %p188 = por %p186, %p187
    %p189 = scmp.ne.s32.totalorder %s178, %s179
    %p190 = scmp.eq.s32.totalorder %s18, 0
    %p191 = por %p189, %p190
    %p192 = scmp.ne.s32.totalorder %s178, %s179
    %p193 = scmp.eq.s32.totalorder %s19, 1
    %p194 = por %p192, %p193
    %p196 = scmp.ne.s32.totalorder %s179, %s195
    %p197 = scmp.eq.s32.totalorder %s19, 0
    %p198 = por %p196, %p197
    %p199 = scmp.le.s32.totalorder 1, %s13
    %p200 = scmp.lt.s32.totalorder %s13, 3
    %p201 = pnand %p199, %p200
    %p202 = pneg %p201
    // Predicated region
    $region9: #{tpu_custom_call.1} parent=5 // pred_check
      _
    $region10: #{tpu_custom_call.1} parent=5 // pred_check_branch
      %204 = sbr.rel (%p201) target = $region12
    $region11: #{tpu_custom_call.1} parent=5 // pred_region
      %s205 = ssub.s32 %s13, 1
      // Predicated region
      $region13: #{tpu_custom_call.1} parent=11 // pred_check
        %p206 = pneg %p60
      $region14: #{tpu_custom_call.1} parent=11 // pred_check_branch
        %208 = sbr.rel (%p206) target = $region16
      $region15: #{tpu_custom_call.1} parent=11 // pred_region
        _
      $region16: #{tpu_custom_call.1} parent=11 // pred_fallthru
        _
      // Predicated region
      $region17: #{tpu_custom_call.1} parent=11 // pred_check
        %p209 = pneg %p81
      $region18: #{tpu_custom_call.1} parent=11 // pred_check_branch
        %211 = sbr.rel (%p209) target = $region20
      $region19: #{tpu_custom_call.1} parent=11 // pred_region
        _
      $region20: #{tpu_custom_call.1} parent=11 // pred_fallthru
        _
      // Predicated region
      $region21: #{tpu_custom_call.1} parent=11 // pred_check
        %p212 = pneg %p102
      $region22: #{tpu_custom_call.1} parent=11 // pred_check_branch
        %214 = sbr.rel (%p212) target = $region24
      $region23: #{tpu_custom_call.1} parent=11 // pred_region
        _
      $region24: #{tpu_custom_call.1} parent=11 // pred_fallthru
        _
      // Predicated region
      $region25: #{tpu_custom_call.1} parent=11 // pred_check
        %p215 = pneg %p123
      $region26: #{tpu_custom_call.1} parent=11 // pred_check_branch
        %217 = sbr.rel (%p215) target = $region28
      $region27: #{tpu_custom_call.1} parent=11 // pred_region
        _
      $region28: #{tpu_custom_call.1} parent=11 // pred_fallthru
        _
      // Predicated region
      $region29: #{tpu_custom_call.1} parent=11 // pred_check
        %p218 = pneg %p144
      $region30: #{tpu_custom_call.1} parent=11 // pred_check_branch
        %220 = sbr.rel (%p218) target = $region32
      $region31: #{tpu_custom_call.1} parent=11 // pred_region
        _
      $region32: #{tpu_custom_call.1} parent=11 // pred_fallthru
        _
      // Predicated region
      $region33: #{tpu_custom_call.1} parent=11 // pred_check
        %p221 = pneg %p165
      $region34: #{tpu_custom_call.1} parent=11 // pred_check_branch
        %223 = sbr.rel (%p221) target = $region36
      $region35: #{tpu_custom_call.1} parent=11 // pred_region
        _
      $region36: #{tpu_custom_call.1} parent=11 // pred_fallthru
        _
    $region12: #{tpu_custom_call.1} parent=5 // pred_fallthru
      _
    %p224 = scmp.lt.s32.totalorder %s13, 2
    // Predicated region
    $region37: #{tpu_custom_call.1} parent=5 // pred_check
      %p225 = pneg %p224
    $region38: #{tpu_custom_call.1} parent=5 // pred_check_branch
      %227 = sbr.rel (%p225) target = $region40
    $region39: #{tpu_custom_call.1} parent=5 // pred_region
      // Predicated region
      $region41: #{tpu_custom_call.1} parent=39 // pred_check
        %p228 = pneg %p33
      $region42: #{tpu_custom_call.1} parent=39 // pred_check_branch
        %230 = sbr.rel (%p228) target = $region44
      $region43: #{tpu_custom_call.1} parent=39 // pred_region
        %s231 = smul.u32 16, %s13
        %p232 = scmp.lt.s32.totalorder %s231, 31
        %s233 = scalar_select %p232, %s231, 31
        %s234 = smul.addr %s233, 8
        %s235 = scalar_lea.vmem %s0, %s234
        %s236 = smul.u32 16, %s13
      $region44: #{tpu_custom_call.1} parent=39 // pred_fallthru
        _
    $region40: #{tpu_custom_call.1} parent=5 // pred_fallthru
      _
    %p237 = scmp.le.s32.totalorder 1, %s13
    %p238 = scmp.lt.s32.totalorder %s13, 3
    %p239 = pnand %p237, %p238
    %p240 = pneg %p239
    // Predicated region
    $region45: #{tpu_custom_call.1} parent=5 // pred_check
      _
    $region46: #{tpu_custom_call.1} parent=5 // pred_check_branch
      %242 = sbr.rel (%p239) target = $region48
    $region47: #{tpu_custom_call.1} parent=5 // pred_region
      %s243 = ssub.s32 %s13, 1
      %s244 = smul.u32 16, %s18
      %p245 = scmp.lt.s32.totalorder %s244, 31
      %s246 = scalar_select %p245, %s244, 31
      %s247 = smul.addr %s246, 8
      %s248 = scalar_lea.vmem %s0, %s247
      %p249 = pneg %p39
      %p250 = pneg %p36
      %p251 = pneg %p60
      %p252 = pneg %p57
      %p253 = pneg %p81
      %p254 = pneg %p78
      %p255 = pneg %p102
      %p256 = pneg %p99
      %p257 = pneg %p123
      %p258 = pneg %p120
      %p259 = pneg %p144
      %p260 = pneg %p141
      %p261 = pneg %p165
      %p262 = pneg %p162
      %p263 = pneg %p191
      %p264 = pneg %p188
      %s265 = smul.u32 16, %s18
      %p266 = scmp.lt.s32.totalorder %s265, 31
      %s267 = scalar_select %p266, %s265, 31
      %s268 = smul.addr %s267, 8
      %s269 = scalar_lea.vmem %s7, %s268
      %s270 = smul.u32 16, %s18
      %p271 = scmp.lt.s32.totalorder %s270, 31
      %s272 = scalar_select %p271, %s270, 31
      %s273 = smul.addr %s272, 8
      %s274 = scalar_lea.vmem %s0, %s273
      %s275 = smul.u32 16, %s18
      %s276 = smul.u32 16, %s18
      %p277 = scmp.lt.s32.totalorder %s276, 31
      %s278 = scalar_select %p277, %s276, 31
      %s279 = smul.addr %s278, 8
      %s280 = scalar_lea.vmem %s7, %s279
      %s281 = smul.u32 16, %s18
      %v282 = vld [vmem:[%s274] sm:$0xff]
      %v283 = vld [vmem:[%s274 + $0x8] sm:$0xff]
      %v284 = vld [vmem:[%s274 + $0x10] sm:$0xff]
      %v285 = vld [vmem:[%s274 + $0x18] sm:$0xff]
      %v286 = vld [vmem:[%s274 + $0x20] sm:$0xff]
      %v287 = vld [vmem:[%s274 + $0x28] sm:$0xff]
      %v288 = vld [vmem:[%s274 + $0x30] sm:$0xff]
      %v289 = vld [vmem:[%s274 + $0x38] sm:$0xff]
      %v290 = vld [vmem:[%s274 + $0x40] sm:$0xff]
      %v291 = vld [vmem:[%s274 + $0x48] sm:$0xff]
      %v292 = vld [vmem:[%s274 + $0x50] sm:$0xff]
      %v293 = vld [vmem:[%s274 + $0x58] sm:$0xff]
      %v294 = vld [vmem:[%s274 + $0x60] sm:$0xff]
      %v295 = vld [vmem:[%s274 + $0x68] sm:$0xff]
      %v296 = vld [vmem:[%s274 + $0x70] sm:$0xff]
      %v297 = vld [vmem:[%s274 + $0x78] sm:$0xff]
      %v298 = vld [vmem:[%s1] sm:$0xff]
      %v299 = vld [vmem:[%s1 + $0x8] sm:$0xff]
      %v300 = vld [vmem:[%s1 + $0x10] sm:$0xff]
      %v301 = vld [vmem:[%s1 + $0x18] sm:$0xff]
      %v302 = vld [vmem:[%s2] sm:$0x1]
      %v304 = vperm.slane %v302, 0
      %vm306 = vcmask 261120
      %v308 = vsel %vm306, %v282, 0
      %v311 = vsel %vm306, %v283, 0
      %v314 = vsel %vm306, %v284, 0
      %v317 = vsel %vm306, %v285, 0
      %v320 = vsel %vm306, %v286, 0
      %v323 = vsel %vm306, %v287, 0
      %v326 = vsel %vm306, %v288, 0
      %v329 = vsel %vm306, %v289, 0
      %v332 = vsel %vm306, %v290, 0
      %v335 = vsel %vm306, %v291, 0
      %v338 = vsel %vm306, %v292, 0
      %v341 = vsel %vm306, %v293, 0
      %v344 = vsel %vm306, %v294, 0
      %v347 = vsel %vm306, %v295, 0
      %v350 = vsel %vm306, %v296, 0
      %v353 = vsel %vm306, %v297, 0
      %355 = vmatpush.msra.mxu0 0.0
      %356 = vmatpush.msra.mxu0 0.0
      %357 = vmatpush.msra.mxu0 0.0
      %358 = vmatpush.msra.mxu0 0.0
      %359 = vmatpush.msra.mxu0 0.0
      %360 = vmatpush.msra.mxu0 0.0
      %361 = vmatpush.msra.mxu0 0.0
      %362 = vmatpush.msra.mxu0 0.0
      %363 = vmatpush.msra.mxu0 0.0
      %364 = vmatpush.msra.mxu0 0.0
      %365 = vmatpush.msra.mxu0 0.0
      %366 = vmatpush.msra.mxu0 0.0
      %367 = vmatpush.msra.mxu0 %v301
      %368 = vmatpush.msra.mxu0 %v300
      %369 = vmatpush.msra.mxu0 %v299
      %370 = vmatpush.msra.mxu0 %v298
      %371 = vmatmul.f32.gmra.mxu0 %v308
      %v372 = vpop.f32.mrf.mxu0
      %v373 = vadd.f32 %v304, %v372
      %374 = vmatmul.f32.gmra.mxu0 %v311
      %v375 = vpop.f32.mrf.mxu0
      %v376 = vadd.f32 %v304, %v375
      %377 = vmatmul.f32.gmra.mxu0 %v314
      %v378 = vpop.f32.mrf.mxu0
      %v379 = vadd.f32 %v304, %v378
      %380 = vmatmul.f32.gmra.mxu0 %v317
      %v381 = vpop.f32.mrf.mxu0
      %v382 = vadd.f32 %v304, %v381
      %383 = vmatmul.f32.gmra.mxu0 %v320
      %v384 = vpop.f32.mrf.mxu0
      %v385 = vadd.f32 %v304, %v384
      %386 = vmatmul.f32.gmra.mxu0 %v323
      %v387 = vpop.f32.mrf.mxu0
      %v388 = vadd.f32 %v304, %v387
      %389 = vmatmul.f32.gmra.mxu0 %v326
      %v390 = vpop.f32.mrf.mxu0
      %v391 = vadd.f32 %v304, %v390
      %392 = vmatmul.f32.gmra.mxu0 %v329
      %v393 = vpop.f32.mrf.mxu0
      %v394 = vadd.f32 %v304, %v393
      %395 = vmatmul.f32.gmra.mxu0 %v332
      %v396 = vpop.f32.mrf.mxu0
      %v397 = vadd.f32 %v304, %v396
      %398 = vmatmul.f32.gmra.mxu0 %v335
      %v399 = vpop.f32.mrf.mxu0
      %v400 = vadd.f32 %v304, %v399
      %401 = vmatmul.f32.gmra.mxu0 %v338
      %v402 = vpop.f32.mrf.mxu0
      %v403 = vadd.f32 %v304, %v402
      %404 = vmatmul.f32.gmra.mxu0 %v341
      %v405 = vpop.f32.mrf.mxu0
      %v406 = vadd.f32 %v304, %v405
      %407 = vmatmul.f32.gmra.mxu0 %v344
      %v408 = vpop.f32.mrf.mxu0
      %v409 = vadd.f32 %v304, %v408
      %410 = vmatmul.f32.gmra.mxu0 %v347
      %v411 = vpop.f32.mrf.mxu0
      %v412 = vadd.f32 %v304, %v411
      %413 = vmatmul.f32.gmra.mxu0 %v350
      %v414 = vpop.f32.mrf.mxu0
      %v415 = vadd.f32 %v304, %v414
      %416 = vmatmul.f32.gmra.mxu0 %v353
      %v417 = vpop.f32.mrf.mxu0
      %v418 = vadd.f32 %v304, %v417
      %419 = vdwg.mxu0
      %v420 = vmax.f32 %v373, 0.0
      %v421 = vmax.f32 %v376, 0.0
      %v422 = vmax.f32 %v379, 0.0
      %v423 = vmax.f32 %v382, 0.0
      %v424 = vmax.f32 %v385, 0.0
      %v425 = vmax.f32 %v388, 0.0
      %v426 = vmax.f32 %v391, 0.0
      %v427 = vmax.f32 %v394, 0.0
      %v428 = vmax.f32 %v397, 0.0
      %v429 = vmax.f32 %v400, 0.0
      %v430 = vmax.f32 %v403, 0.0
      %v431 = vmax.f32 %v406, 0.0
      %v432 = vmax.f32 %v409, 0.0
      %v433 = vmax.f32 %v412, 0.0
      %v434 = vmax.f32 %v415, 0.0
      %v435 = vmax.f32 %v418, 0.0
      %v436 = vld [vmem:[%s3] sm:$0xff]
      %v437 = vld [vmem:[%s3 + $0x8] sm:$0xff]
      %v438 = vld [vmem:[%s3 + $0x10] sm:$0xff]
      %v439 = vld [vmem:[%s3 + $0x18] sm:$0xff]
      %v440 = vld [vmem:[%s3 + $0x20] sm:$0xff]
      %v441 = vld [vmem:[%s3 + $0x28] sm:$0xff]
      %v442 = vld [vmem:[%s3 + $0x30] sm:$0xff]
      %v443 = vld [vmem:[%s3 + $0x38] sm:$0xff]
      %v444 = vld [vmem:[%s3 + $0x40] sm:$0xff]
      %v445 = vld [vmem:[%s3 + $0x48] sm:$0xff]
      %v446 = vld [vmem:[%s3 + $0x50] sm:$0xff]
      %v447 = vld [vmem:[%s3 + $0x58] sm:$0xff]
      %v448 = vld [vmem:[%s3 + $0x60] sm:$0xff]
      %v449 = vld [vmem:[%s3 + $0x68] sm:$0xff]
      %v450 = vld [vmem:[%s3 + $0x70] sm:$0xff]
      %v451 = vld [vmem:[%s3 + $0x78] sm:$0xff]
      %v452 = vld [vmem:[%s4] sm:$0x1]
      %v454 = vperm.slane %v452, 0
      %456 = vmatpush.msra.mxu0 %v451
      %457 = vmatpush.msra.mxu0 %v450
      %458 = vmatpush.msra.mxu0 %v449
      %459 = vmatpush.msra.mxu0 %v448
      %460 = vmatpush.msra.mxu0 %v447
      %461 = vmatpush.msra.mxu0 %v446
      %462 = vmatpush.msra.mxu0 %v445
      %463 = vmatpush.msra.mxu0 %v444
      %464 = vmatpush.msra.mxu0 %v443
      %465 = vmatpush.msra.mxu0 %v442
      %466 = vmatpush.msra.mxu0 %v441
      %467 = vmatpush.msra.mxu0 %v440
      %468 = vmatpush.msra.mxu0 %v439
      %469 = vmatpush.msra.mxu0 %v438
      %470 = vmatpush.msra.mxu0 %v437
      %471 = vmatpush.msra.mxu0 %v436
      %472 = vmatmul.f32.gmra.mxu0 %v420
      %v473 = vpop.f32.mrf.mxu0
      %v474 = vadd.f32 %v454, %v473
      %475 = vmatmul.f32.gmra.mxu0 %v421
      %v476 = vpop.f32.mrf.mxu0
      %v477 = vadd.f32 %v454, %v476
      %478 = vmatmul.f32.gmra.mxu0 %v422
      %v479 = vpop.f32.mrf.mxu0
      %v480 = vadd.f32 %v454, %v479
      %481 = vmatmul.f32.gmra.mxu0 %v423
      %v482 = vpop.f32.mrf.mxu0
      %v483 = vadd.f32 %v454, %v482
      %484 = vmatmul.f32.gmra.mxu0 %v424
      %v485 = vpop.f32.mrf.mxu0
      %v486 = vadd.f32 %v454, %v485
      %487 = vmatmul.f32.gmra.mxu0 %v425
      %v488 = vpop.f32.mrf.mxu0
      %v489 = vadd.f32 %v454, %v488
      %490 = vmatmul.f32.gmra.mxu0 %v426
      %v491 = vpop.f32.mrf.mxu0
      %v492 = vadd.f32 %v454, %v491
      %493 = vmatmul.f32.gmra.mxu0 %v427
      %v494 = vpop.f32.mrf.mxu0
      %v495 = vadd.f32 %v454, %v494
      %496 = vmatmul.f32.gmra.mxu0 %v428
      %v497 = vpop.f32.mrf.mxu0
      %v498 = vadd.f32 %v454, %v497
      %499 = vmatmul.f32.gmra.mxu0 %v429
      %v500 = vpop.f32.mrf.mxu0
      %v501 = vadd.f32 %v454, %v500
      %502 = vmatmul.f32.gmra.mxu0 %v430
      %v503 = vpop.f32.mrf.mxu0
      %v504 = vadd.f32 %v454, %v503
      %505 = vmatmul.f32.gmra.mxu0 %v431
      %v506 = vpop.f32.mrf.mxu0
      %v507 = vadd.f32 %v454, %v506
      %508 = vmatmul.f32.gmra.mxu0 %v432
      %v509 = vpop.f32.mrf.mxu0
      %v510 = vadd.f32 %v454, %v509
      %511 = vmatmul.f32.gmra.mxu0 %v433
      %v512 = vpop.f32.mrf.mxu0
      %v513 = vadd.f32 %v454, %v512
      %514 = vmatmul.f32.gmra.mxu0 %v434
      %v515 = vpop.f32.mrf.mxu0
      %v516 = vadd.f32 %v454, %v515
      %517 = vmatmul.f32.gmra.mxu0 %v435
      %v518 = vpop.f32.mrf.mxu0
      %v519 = vadd.f32 %v454, %v518
      %520 = vdwg.mxu0
      %v521 = vsel %vm306, %v474, 0.0
      %522 = vadd.xlane.f32.xlu0 %v521
      %v523 = vpop.xlane.xlu0 %522
      %v524 = vsel %vm306, %v477, 0.0
      %525 = vadd.xlane.f32.xlu0 %v524
      %v526 = vpop.xlane.xlu0 %525
      %v527 = vsel %vm306, %v480, 0.0
      %528 = vadd.xlane.f32.xlu0 %v527
      %v529 = vpop.xlane.xlu0 %528
      %v530 = vsel %vm306, %v483, 0.0
      %531 = vadd.xlane.f32.xlu0 %v530
      %v532 = vpop.xlane.xlu0 %531
      %v533 = vsel %vm306, %v486, 0.0
      %534 = vadd.xlane.f32.xlu0 %v533
      %v535 = vpop.xlane.xlu0 %534
      %v536 = vsel %vm306, %v489, 0.0
      %537 = vadd.xlane.f32.xlu0 %v536
      %v538 = vpop.xlane.xlu0 %537
      %v539 = vsel %vm306, %v492, 0.0
      %540 = vadd.xlane.f32.xlu0 %v539
      %v541 = vpop.xlane.xlu0 %540
      %v542 = vsel %vm306, %v495, 0.0
      %543 = vadd.xlane.f32.xlu0 %v542
      %v544 = vpop.xlane.xlu0 %543
      %v545 = vsel %vm306, %v498, 0.0
      %546 = vadd.xlane.f32.xlu0 %v545
      %v547 = vpop.xlane.xlu0 %546
      %v548 = vsel %vm306, %v501, 0.0
      %549 = vadd.xlane.f32.xlu0 %v548
      %v550 = vpop.xlane.xlu0 %549
      %v551 = vsel %vm306, %v504, 0.0
      %552 = vadd.xlane.f32.xlu0 %v551
      %v553 = vpop.xlane.xlu0 %552
      %v554 = vsel %vm306, %v507, 0.0
      %555 = vadd.xlane.f32.xlu0 %v554
      %v556 = vpop.xlane.xlu0 %555
      %v557 = vsel %vm306, %v510, 0.0
      %558 = vadd.xlane.f32.xlu0 %v557
      %v559 = vpop.xlane.xlu0 %558
      %v560 = vsel %vm306, %v513, 0.0
      %561 = vadd.xlane.f32.xlu0 %v560
      %v562 = vpop.xlane.xlu0 %561
      %v563 = vsel %vm306, %v516, 0.0
      %564 = vadd.xlane.f32.xlu0 %v563
      %v565 = vpop.xlane.xlu0 %564
      %v566 = vsel %vm306, %v519, 0.0
      %567 = vadd.xlane.f32.xlu0 %v566
      %v568 = vpop.xlane.xlu0 %567
      %v569 = vrcp.pop 32.0
      %v570 = vmul.f32 32.0, %v569
      %v571 = vsub.f32 1.0, %v570
      %v572 = vmul.f32 %v569, %v571
      %v573 = vadd.f32 %v569, %v572
      %vm574 = vweird.f32 %v569
      %v575 = vsel %vm574, %v569, %v573
      %v576 = vmul.f32 %v523, %v575
      %v577 = vmul.f32 %v526, %v575
      %v578 = vmul.f32 %v529, %v575
      %v579 = vmul.f32 %v532, %v575
      %v580 = vmul.f32 %v535, %v575
      %v581 = vmul.f32 %v538, %v575
      %v582 = vmul.f32 %v541, %v575
      %v583 = vmul.f32 %v544, %v575
      %v584 = vmul.f32 %v547, %v575
      %v585 = vmul.f32 %v550, %v575
      %v586 = vmul.f32 %v553, %v575
      %v587 = vmul.f32 %v556, %v575
      %v588 = vmul.f32 %v559, %v575
      %v589 = vmul.f32 %v562, %v575
      %v590 = vmul.f32 %v565, %v575
      %v591 = vmul.f32 %v568, %v575
      %v592 = vsub.f32 %v474, %v576
      %v593 = vsub.f32 %v477, %v577
      %v594 = vsub.f32 %v480, %v578
      %v595 = vsub.f32 %v483, %v579
      %v596 = vsub.f32 %v486, %v580
      %v597 = vsub.f32 %v489, %v581
      %v598 = vsub.f32 %v492, %v582
      %v599 = vsub.f32 %v495, %v583
      %v600 = vsub.f32 %v498, %v584
      %v601 = vsub.f32 %v501, %v585
      %v602 = vsub.f32 %v504, %v586
      %v603 = vsub.f32 %v507, %v587
      %v604 = vsub.f32 %v510, %v588
      %v605 = vsub.f32 %v513, %v589
      %v606 = vsub.f32 %v516, %v590
      %v607 = vsub.f32 %v519, %v591
      %v608 = vmul.f32 %v592, %v592
      %v609 = vmul.f32 %v593, %v593
      %v610 = vmul.f32 %v594, %v594
      %v611 = vmul.f32 %v595, %v595
      %v612 = vmul.f32 %v596, %v596
      %v613 = vmul.f32 %v597, %v597
      %v614 = vmul.f32 %v598, %v598
      %v615 = vmul.f32 %v599, %v599
      %v616 = vmul.f32 %v600, %v600
      %v617 = vmul.f32 %v601, %v601
      %v618 = vmul.f32 %v602, %v602
      %v619 = vmul.f32 %v603, %v603
      %v620 = vmul.f32 %v604, %v604
      %v621 = vmul.f32 %v605, %v605
      %v622 = vmul.f32 %v606, %v606
      %v623 = vmul.f32 %v607, %v607
      %v624 = vsel %vm306, %v608, 0.0
      %625 = vadd.xlane.f32.xlu0 %v624
      %v626 = vpop.xlane.xlu0 %625
      %v627 = vsel %vm306, %v609, 0.0
      %628 = vadd.xlane.f32.xlu0 %v627
      %v629 = vpop.xlane.xlu0 %628
      %v630 = vsel %vm306, %v610, 0.0
      %631 = vadd.xlane.f32.xlu0 %v630
      %v632 = vpop.xlane.xlu0 %631
      %v633 = vsel %vm306, %v611, 0.0
      %634 = vadd.xlane.f32.xlu0 %v633
      %v635 = vpop.xlane.xlu0 %634
      %v636 = vsel %vm306, %v612, 0.0
      %637 = vadd.xlane.f32.xlu0 %v636
      %v638 = vpop.xlane.xlu0 %637
      %v639 = vsel %vm306, %v613, 0.0
      %640 = vadd.xlane.f32.xlu0 %v639
      %v641 = vpop.xlane.xlu0 %640
      %v642 = vsel %vm306, %v614, 0.0
      %643 = vadd.xlane.f32.xlu0 %v642
      %v644 = vpop.xlane.xlu0 %643
      %v645 = vsel %vm306, %v615, 0.0
      %646 = vadd.xlane.f32.xlu0 %v645
      %v647 = vpop.xlane.xlu0 %646
      %v648 = vsel %vm306, %v616, 0.0
      %649 = vadd.xlane.f32.xlu0 %v648
      %v650 = vpop.xlane.xlu0 %649
      %v651 = vsel %vm306, %v617, 0.0
      %652 = vadd.xlane.f32.xlu0 %v651
      %v653 = vpop.xlane.xlu0 %652
      %v654 = vsel %vm306, %v618, 0.0
      %655 = vadd.xlane.f32.xlu0 %v654
      %v656 = vpop.xlane.xlu0 %655
      %v657 = vsel %vm306, %v619, 0.0
      %658 = vadd.xlane.f32.xlu0 %v657
      %v659 = vpop.xlane.xlu0 %658
      %v660 = vsel %vm306, %v620, 0.0
      %661 = vadd.xlane.f32.xlu0 %v660
      %v662 = vpop.xlane.xlu0 %661
      %v663 = vsel %vm306, %v621, 0.0
      %664 = vadd.xlane.f32.xlu0 %v663
      %v665 = vpop.xlane.xlu0 %664
      %v666 = vsel %vm306, %v622, 0.0
      %667 = vadd.xlane.f32.xlu0 %v666
      %v668 = vpop.xlane.xlu0 %667
      %v669 = vsel %vm306, %v623, 0.0
      %670 = vadd.xlane.f32.xlu0 %v669
      %v671 = vpop.xlane.xlu0 %670
      %v672 = vmul.f32 %v626, %v575
      %v673 = vmul.f32 %v629, %v575
      %v674 = vmul.f32 %v632, %v575
      %v675 = vmul.f32 %v635, %v575
      %v676 = vmul.f32 %v638, %v575
      %v677 = vmul.f32 %v641, %v575
      %v678 = vmul.f32 %v644, %v575
      %v679 = vmul.f32 %v647, %v575
      %v680 = vmul.f32 %v650, %v575
      %v681 = vmul.f32 %v653, %v575
      %v682 = vmul.f32 %v656, %v575
      %v683 = vmul.f32 %v659, %v575
      %v684 = vmul.f32 %v662, %v575
      %v685 = vmul.f32 %v665, %v575
      %v686 = vmul.f32 %v668, %v575
      %v687 = vmul.f32 %v671, %v575
      %v688 = vadd.f32 %v672, 1e-05
      %v689 = vadd.f32 %v673, 1e-05
      %v690 = vadd.f32 %v674, 1e-05
      %v691 = vadd.f32 %v675, 1e-05
      %v692 = vadd.f32 %v676, 1e-05
      %v693 = vadd.f32 %v677, 1e-05
      %v694 = vadd.f32 %v678, 1e-05
      %v695 = vadd.f32 %v679, 1e-05
      %v696 = vadd.f32 %v680, 1e-05
      %v697 = vadd.f32 %v681, 1e-05
      %v698 = vadd.f32 %v682, 1e-05
      %v699 = vadd.f32 %v683, 1e-05
      %v700 = vadd.f32 %v684, 1e-05
      %v701 = vadd.f32 %v685, 1e-05
      %v702 = vadd.f32 %v686, 1e-05
      %v703 = vadd.f32 %v687, 1e-05
      %v704 = vrsqrt.pop %v688
      %v705 = vmul.f32 %v704, %v688
      %v706 = vmul.f32 %v705, %v704
      %v707 = vmul.f32 0.5, %v706
      %v708 = vsub.f32 1.5, %v707
      %v709 = vmul.f32 %v704, %v708
      %vm710 = vweird.f32 %v688
      %vm711 = vweird.f32 %v704
      %vm712 = vmor %vm710, %vm711
      %v713 = vsel %vm712, %v704, %v709
      %v714 = vrsqrt.pop %v689
      %v715 = vmul.f32 %v714, %v689
      %v716 = vmul.f32 %v715, %v714
      %v717 = vmul.f32 0.5, %v716
      %v718 = vsub.f32 1.5, %v717
      %v719 = vmul.f32 %v714, %v718
      %vm720 = vweird.f32 %v689
      %vm721 = vweird.f32 %v714
      %vm722 = vmor %vm720, %vm721
      %v723 = vsel %vm722, %v714, %v719
      %v724 = vrsqrt.pop %v690
      %v725 = vmul.f32 %v724, %v690
      %v726 = vmul.f32 %v725, %v724
      %v727 = vmul.f32 0.5, %v726
      %v728 = vsub.f32 1.5, %v727
      %v729 = vmul.f32 %v724, %v728
      %vm730 = vweird.f32 %v690
      %vm731 = vweird.f32 %v724
      %vm732 = vmor %vm730, %vm731
      %v733 = vsel %vm732, %v724, %v729
      %v734 = vrsqrt.pop %v691
      %v735 = vmul.f32 %v734, %v691
      %v736 = vmul.f32 %v735, %v734
      %v737 = vmul.f32 0.5, %v736
      %v738 = vsub.f32 1.5, %v737
      %v739 = vmul.f32 %v734, %v738
      %vm740 = vweird.f32 %v691
      %vm741 = vweird.f32 %v734
      %vm742 = vmor %vm740, %vm741
      %v743 = vsel %vm742, %v734, %v739
      %v744 = vrsqrt.pop %v692
      %v745 = vmul.f32 %v744, %v692
      %v746 = vmul.f32 %v745, %v744
      %v747 = vmul.f32 0.5, %v746
      %v748 = vsub.f32 1.5, %v747
      %v749 = vmul.f32 %v744, %v748
      %vm750 = vweird.f32 %v692
      %vm751 = vweird.f32 %v744
      %vm752 = vmor %vm750, %vm751
      %v753 = vsel %vm752, %v744, %v749
      %v754 = vrsqrt.pop %v693
      %v755 = vmul.f32 %v754, %v693
      %v756 = vmul.f32 %v755, %v754
      %v757 = vmul.f32 0.5, %v756
      %v758 = vsub.f32 1.5, %v757
      %v759 = vmul.f32 %v754, %v758
      %vm760 = vweird.f32 %v693
      %vm761 = vweird.f32 %v754
      %vm762 = vmor %vm760, %vm761
      %v763 = vsel %vm762, %v754, %v759
      %v764 = vrsqrt.pop %v694
      %v765 = vmul.f32 %v764, %v694
      %v766 = vmul.f32 %v765, %v764
      %v767 = vmul.f32 0.5, %v766
      %v768 = vsub.f32 1.5, %v767
      %v769 = vmul.f32 %v764, %v768
      %vm770 = vweird.f32 %v694
      %vm771 = vweird.f32 %v764
      %vm772 = vmor %vm770, %vm771
      %v773 = vsel %vm772, %v764, %v769
      %v774 = vrsqrt.pop %v695
      %v775 = vmul.f32 %v774, %v695
      %v776 = vmul.f32 %v775, %v774
      %v777 = vmul.f32 0.5, %v776
      %v778 = vsub.f32 1.5, %v777
      %v779 = vmul.f32 %v774, %v778
      %vm780 = vweird.f32 %v695
      %vm781 = vweird.f32 %v774
      %vm782 = vmor %vm780, %vm781
      %v783 = vsel %vm782, %v774, %v779
      %v784 = vrsqrt.pop %v696
      %v785 = vmul.f32 %v784, %v696
      %v786 = vmul.f32 %v785, %v784
      %v787 = vmul.f32 0.5, %v786
      %v788 = vsub.f32 1.5, %v787
      %v789 = vmul.f32 %v784, %v788
      %vm790 = vweird.f32 %v696
      %vm791 = vweird.f32 %v784
      %vm792 = vmor %vm790, %vm791
      %v793 = vsel %vm792, %v784, %v789
      %v794 = vrsqrt.pop %v697
      %v795 = vmul.f32 %v794, %v697
      %v796 = vmul.f32 %v795, %v794
      %v797 = vmul.f32 0.5, %v796
      %v798 = vsub.f32 1.5, %v797
      %v799 = vmul.f32 %v794, %v798
      %vm800 = vweird.f32 %v697
      %vm801 = vweird.f32 %v794
      %vm802 = vmor %vm800, %vm801
      %v803 = vsel %vm802, %v794, %v799
      %v804 = vrsqrt.pop %v698
      %v805 = vmul.f32 %v804, %v698
      %v806 = vmul.f32 %v805, %v804
      %v807 = vmul.f32 0.5, %v806
      %v808 = vsub.f32 1.5, %v807
      %v809 = vmul.f32 %v804, %v808
      %vm810 = vweird.f32 %v698
      %vm811 = vweird.f32 %v804
      %vm812 = vmor %vm810, %vm811
      %v813 = vsel %vm812, %v804, %v809
      %v814 = vrsqrt.pop %v699
      %v815 = vmul.f32 %v814, %v699
      %v816 = vmul.f32 %v815, %v814
      %v817 = vmul.f32 0.5, %v816
      %v818 = vsub.f32 1.5, %v817
      %v819 = vmul.f32 %v814, %v818
      %vm820 = vweird.f32 %v699
      %vm821 = vweird.f32 %v814
      %vm822 = vmor %vm820, %vm821
      %v823 = vsel %vm822, %v814, %v819
      %v824 = vrsqrt.pop %v700
      %v825 = vmul.f32 %v824, %v700
      %v826 = vmul.f32 %v825, %v824
      %v827 = vmul.f32 0.5, %v826
      %v828 = vsub.f32 1.5, %v827
      %v829 = vmul.f32 %v824, %v828
      %vm830 = vweird.f32 %v700
      %vm831 = vweird.f32 %v824
      %vm832 = vmor %vm830, %vm831
      %v833 = vsel %vm832, %v824, %v829
      %v834 = vrsqrt.pop %v701
      %v835 = vmul.f32 %v834, %v701
      %v836 = vmul.f32 %v835, %v834
      %v837 = vmul.f32 0.5, %v836
      %v838 = vsub.f32 1.5, %v837
      %v839 = vmul.f32 %v834, %v838
      %vm840 = vweird.f32 %v701
      %vm841 = vweird.f32 %v834
      %vm842 = vmor %vm840, %vm841
      %v843 = vsel %vm842, %v834, %v839
      %v844 = vrsqrt.pop %v702
      %v845 = vmul.f32 %v844, %v702
      %v846 = vmul.f32 %v845, %v844
      %v847 = vmul.f32 0.5, %v846
      %v848 = vsub.f32 1.5, %v847
      %v849 = vmul.f32 %v844, %v848
      %vm850 = vweird.f32 %v702
      %vm851 = vweird.f32 %v844
      %vm852 = vmor %vm850, %vm851
      %v853 = vsel %vm852, %v844, %v849
      %v854 = vrsqrt.pop %v703
      %v855 = vmul.f32 %v854, %v703
      %v856 = vmul.f32 %v855, %v854
      %v857 = vmul.f32 0.5, %v856
      %v858 = vsub.f32 1.5, %v857
      %v859 = vmul.f32 %v854, %v858
      %vm860 = vweird.f32 %v703
      %vm861 = vweird.f32 %v854
      %vm862 = vmor %vm860, %vm861
      %v863 = vsel %vm862, %v854, %v859
      %v864 = vmul.f32 %v592, %v713
      %v865 = vmul.f32 %v593, %v723
      %v866 = vmul.f32 %v594, %v733
      %v867 = vmul.f32 %v595, %v743
      %v868 = vmul.f32 %v596, %v753
      %v869 = vmul.f32 %v597, %v763
      %v870 = vmul.f32 %v598, %v773
      %v871 = vmul.f32 %v599, %v783
      %v872 = vmul.f32 %v600, %v793
      %v873 = vmul.f32 %v601, %v803
      %v874 = vmul.f32 %v602, %v813
      %v875 = vmul.f32 %v603, %v823
      %v876 = vmul.f32 %v604, %v833
      %v877 = vmul.f32 %v605, %v843
      %v878 = vmul.f32 %v606, %v853
      %v879 = vmul.f32 %v607, %v863
      %v880 = vld [vmem:[%s5] sm:$0x1]
      %v882 = vperm.slane %v880, 0
      %v884 = vmul.f32 %v864, %v882
      %v885 = vmul.f32 %v865, %v882
      %v886 = vmul.f32 %v866, %v882
      %v887 = vmul.f32 %v867, %v882
      %v888 = vmul.f32 %v868, %v882
      %v889 = vmul.f32 %v869, %v882
      %v890 = vmul.f32 %v870, %v882
      %v891 = vmul.f32 %v871, %v882
      %v892 = vmul.f32 %v872, %v882
      %v893 = vmul.f32 %v873, %v882
      %v894 = vmul.f32 %v874, %v882
      %v895 = vmul.f32 %v875, %v882
      %v896 = vmul.f32 %v876, %v882
      %v897 = vmul.f32 %v877, %v882
      %v898 = vmul.f32 %v878, %v882
      %v899 = vmul.f32 %v879, %v882
      %v900 = vld [vmem:[%s6] sm:$0x1]
      %v902 = vperm.slane %v900, 0
      %v904 = vadd.f32 %v884, %v902
      %v905 = vadd.f32 %v885, %v902
      %v906 = vadd.f32 %v886, %v902
      %v907 = vadd.f32 %v887, %v902
      %v908 = vadd.f32 %v888, %v902
      %v909 = vadd.f32 %v889, %v902
      %v910 = vadd.f32 %v890, %v902
      %v911 = vadd.f32 %v891, %v902
      %v912 = vadd.f32 %v892, %v902
      %v913 = vadd.f32 %v893, %v902
      %v914 = vadd.f32 %v894, %v902
      %v915 = vadd.f32 %v895, %v902
      %v916 = vadd.f32 %v896, %v902
      %v917 = vadd.f32 %v897, %v902
      %v918 = vadd.f32 %v898, %v902
      %v919 = vadd.f32 %v899, %v902
      %920 = vst.msk [vmem:[%s280] sm:$0xff] %vm306, %v904
      %921 = vst.msk [vmem:[%s280 + $0x8] sm:$0xff] %vm306, %v905
      %922 = vst.msk [vmem:[%s280 + $0x10] sm:$0xff] %vm306, %v906
      %923 = vst.msk [vmem:[%s280 + $0x18] sm:$0xff] %vm306, %v907
      %924 = vst.msk [vmem:[%s280 + $0x20] sm:$0xff] %vm306, %v908
      %925 = vst.msk [vmem:[%s280 + $0x28] sm:$0xff] %vm306, %v909
      %926 = vst.msk [vmem:[%s280 + $0x30] sm:$0xff] %vm306, %v910
      %927 = vst.msk [vmem:[%s280 + $0x38] sm:$0xff] %vm306, %v911
      %928 = vst.msk [vmem:[%s280 + $0x40] sm:$0xff] %vm306, %v912
      %929 = vst.msk [vmem:[%s280 + $0x48] sm:$0xff] %vm306, %v913
      %930 = vst.msk [vmem:[%s280 + $0x50] sm:$0xff] %vm306, %v914
      %931 = vst.msk [vmem:[%s280 + $0x58] sm:$0xff] %vm306, %v915
      %932 = vst.msk [vmem:[%s280 + $0x60] sm:$0xff] %vm306, %v916
      %933 = vst.msk [vmem:[%s280 + $0x68] sm:$0xff] %vm306, %v917
      %934 = vst.msk [vmem:[%s280 + $0x70] sm:$0xff] %vm306, %v918
      %935 = vst.msk [vmem:[%s280 + $0x78] sm:$0xff] %vm306, %v919
      %s936 = smul.u32 16, %s18
      %p937 = scmp.lt.s32.totalorder %s936, 31
      %s938 = scalar_select %p937, %s936, 31
      %s939 = smul.addr %s938, 8
      %s940 = scalar_lea.vmem %s7, %s939
      // Predicated region
      $region49: #{tpu_custom_call.1} parent=47 // pred_check
        %p941 = pneg %p188
      $region50: #{tpu_custom_call.1} parent=47 // pred_check_branch
        %943 = sbr.rel (%p941) target = $region52
      $region51: #{tpu_custom_call.1} parent=47 // pred_region
        %s944 = smul.u32 16, %s18
      $region52: #{tpu_custom_call.1} parent=47 // pred_fallthru
        _
    $region48: #{tpu_custom_call.1} parent=5 // pred_fallthru
      _
    %p945 = scmp.le.s32.totalorder 2, %s13
    // Predicated region
    $region53: #{tpu_custom_call.1} parent=5 // pred_check
      %p946 = pneg %p945
    $region54: #{tpu_custom_call.1} parent=5 // pred_check_branch
      %948 = sbr.rel (%p946) target = $region56
    $region55: #{tpu_custom_call.1} parent=5 // pred_region
      %s949 = ssub.s32 %s13, 2
      // Predicated region
      $region57: #{tpu_custom_call.1} parent=55 // pred_check
        %p950 = pneg %p194
      $region58: #{tpu_custom_call.1} parent=55 // pred_check_branch
        %952 = sbr.rel (%p950) target = $region60
      $region59: #{tpu_custom_call.1} parent=55 // pred_region
        %s953 = smul.u32 16, %s19
        %p954 = scmp.lt.s32.totalorder %s953, 31
        %s955 = scalar_select %p954, %s953, 31
        %s956 = smul.addr %s955, 8
        %s957 = scalar_lea.vmem %s7, %s956
      $region60: #{tpu_custom_call.1} parent=55 // pred_fallthru
        _
    $region56: #{tpu_custom_call.1} parent=5 // pred_fallthru
      _
  $region6: #{tpu_custom_call.1} parent=0 // loop_footer
    %s17 = sadd.s32 1, %s13
  $region7: #{tpu_custom_call.1} parent=0 // loop_footer_branch
    %12 = sbr.rel target = $region3
  $region8: #{tpu_custom_call.1} parent=0 // loop_exit
    _

</llo_original>
